<compile_context>
chip_gen: v7x
topology: tpu7x:2x2x1
jax: 0.10.0
libtpu: 0.0.40
codegen_flags: <defaults>
</compile_context>

<pallas_src>
import math
import functools

import jax
import jax.numpy as jnp
from jax.experimental import pallas as pl
from jax.experimental.pallas import tpu as pltpu

_LANE = 128


# ---------------------------------------------------------------------------
# Parameter / buffer setup (deterministic, mirrors nn.Module.__init__)
# ---------------------------------------------------------------------------
def build_pe_table(d_model: int, max_len: int = 3000) -> jnp.ndarray:
    position = jnp.arange(0, max_len, dtype=jnp.float32)[:, None]          # (L, 1)
    div_term = jnp.exp(jnp.arange(0, d_model, 2, dtype=jnp.float32)
                       * (-math.log(10000.0) / d_model))                   # (D/2,)
    angles = position * div_term                                            # (L, D/2)
    pe = jnp.zeros((max_len, d_model), dtype=jnp.float32)
    pe = pe.at[:, 0::2].set(jnp.sin(angles))
    pe = pe.at[:, 1::2].set(jnp.cos(angles))
    return pe                                                               # (L, D)


# ---------------------------------------------------------------------------
# Pallas kernels
# ---------------------------------------------------------------------------
def _spe_eval_kernel(x_ref, pe_ref, o_ref):
    # x_ref/o_ref: (B, TN); pe_ref: (1, TN) -> broadcast over sublanes.
    o_ref[...] = (x_ref[...] + pe_ref[...]).astype(o_ref.dtype)


def _spe_train_kernel(x_ref, pe_ref, bits_ref, o_ref, *, threshold, scale):
    # Dropout: keep with prob (1 - p), scale kept values by 1/(1 - p).
    # bits_ref holds uniform int32 values in [0, 2^24); keep-test is a single
    # integer compare (no int->float convert in the kernel).
    y = x_ref[...] + pe_ref[...]
    keep = bits_ref[...] >= jnp.int32(threshold)
    o_ref[...] = jnp.where(keep, y * jnp.float32(scale), 0.0).astype(o_ref.dtype)


# ---------------------------------------------------------------------------
# Wrapper
# ---------------------------------------------------------------------------
def _choose_col_tile(batch, n_cols, n_streams, elem_bytes,
                     block_budget_bytes=4 * 1024 * 1024):
    """Largest lane-aligned column tile whose (double-buffered) blocks fit the
    budget.  Safe for v5e (16 MiB scoped VMEM default), v6e, and v7x."""
    per_col = (n_streams * batch + 1) * elem_bytes * 2   # streams + pe, 2x bufs
    tn = (block_budget_bytes // per_col) // _LANE * _LANE
    tn = max(_LANE, tn)
    return n_cols if tn >= n_cols else tn


def spectral_positional_encoding(x, pe, *, dropout_p=0.1, training=False,
                                 rng_key=None):
    """x: (B, S, D); pe: (max_len, D).  Returns dropout(x + pe[:S])."""
    B, S, D = x.shape
    assert pe.shape[0] >= S and pe.shape[1] == D
    N = S * D

    # Lane-dense 2-D layout: (B, S, D) -> (B, S*D); pe[:S] -> (1, S*D).
    x2 = x.reshape(B, N)
    pe2 = pe[:S, :].reshape(1, N)

    use_dropout = bool(training) and float(dropout_p) > 0.0
    n_streams = 3 if use_dropout else 2     # x + out (+ dropout bits)
    tn = _choose_col_tile(B, N, n_streams, jnp.dtype(x.dtype).itemsize)
    grid = (pl.cdiv(N, tn),)

    x_spec = pl.BlockSpec((B, tn), lambda j: (0, j))
    pe_spec = pl.BlockSpec((1, tn), lambda j: (0, j))
    bits_spec = pl.BlockSpec((B, tn), lambda j: (0, j))
    o_spec = pl.BlockSpec((B, tn), lambda j: (0, j))
    out_shape = jax.ShapeDtypeStruct((B, N), x.dtype)

    cparams = pltpu.CompilerParams(
        dimension_semantics=("parallel",),
        vmem_limit_bytes=32 * 1024 * 1024)

    if not use_dropout:
        out2 = pl.pallas_call(
            _spe_eval_kernel,
            out_shape=out_shape,
            grid=grid,
            in_specs=[x_spec, pe_spec],
            out_specs=o_spec,
            compiler_params=cparams,
        )(x2, pe2)
        return out2.reshape(B, S, D)

    # Training path.
    if rng_key is None:
        rng_key = jax.random.PRNGKey(0)
    # TODO(synk): dropout randomness comes from jax.random outside the kernel
    # (pltpu.prng_seed/prng_random_bits have no interpret/CPU lowering); the
    # keep-test itself stays in-kernel in the integer domain.  PyTorch's exact
    # dropout RNG stream is not reproducible bit-for-bit.
    bits24 = (jax.random.bits(rng_key, (B, N), jnp.uint32) >> 8).astype(jnp.int32)

    p = float(dropout_p)
    threshold = min(int(round(p * float(1 << 24))), (1 << 24) - 1)
    kernel = functools.partial(_spe_train_kernel,
                               threshold=threshold,
                               scale=1.0 / (1.0 - p))
    out2 = pl.pallas_call(
        kernel,
        out_shape=out_shape,
        grid=grid,
        in_specs=[x_spec, pe_spec, bits_spec],
        out_specs=o_spec,
        compiler_params=cparams,
    )(x2, pe2, bits24)
    return out2.reshape(B, S, D)


# ---------------------------------------------------------------------------
# Demo / correctness check
# ---------------------------------------------------------------------------
if __name__ == "__main__":
    B, S, D = 2, 8, 32
    MAX_LEN = 3000
    P = 0.1

    key = jax.random.PRNGKey(0)
    x = jax.random.normal(key, (B, S, D), dtype=jnp.float32)
    pe = build_pe_table(D, MAX_LEN)

    # Pure-JAX reference for eval mode.
    ref = x + pe[None, :S, :]

    # Eval-mode forward (dropout is identity).
    out_eval = spectral_positional_encoding(x, pe, dropout_p=P, training=False)
    out_eval = jax.block_until_ready(out_eval)
    assert out_eval.shape == (B, S, D)
    assert jnp.allclose(out_eval, ref, atol=1e-6, rtol=1e-6)

    # Training-mode forward (dropout mask applied inside the kernel).
    out_train = spectral_positional_encoding(
        x, pe, dropout_p=P, training=True, rng_key=jax.random.PRNGKey(42))
    out_train = jax.block_until_ready(out_train)
    assert out_train.shape == (B, S, D)
    # Every element is either dropped (0) or scaled by 1/(1-p).
    scale = 1.0 / (1.0 - P)
    ok = (jnp.isclose(out_train, 0.0, atol=1e-6)
          | jnp.isclose(out_train, ref * scale, atol=1e-5, rtol=1e-5))
    assert bool(jnp.all(ok))

    print("KERNEL_OK")
</pallas_src>

<mosaic_0001>
module attributes {stable_mosaic.version = 11 : i64} {
  func.func @_spe_eval_kernel(%arg0: i32, %arg1: memref<2x256xf32, #tpu.memory_space<vmem>>, %arg2: memref<1x256xf32, #tpu.memory_space<vmem>>, %arg3: memref<2x256xf32, #tpu.memory_space<vmem>>) attributes {dimension_semantics = [#tpu.dimension_semantics<parallel>], iteration_bounds = array<i64: 1>, scalar_prefetch = 0 : i64, scratch_operands = 0 : i64, tpu.core_type = #tpu.core_type<tc>, window_params = [{transform_indices = @transform_0, window_bounds = array<i64: 2, 256>}, {transform_indices = @transform_1, window_bounds = array<i64: 1, 256>}, {transform_indices = @transform_2, window_bounds = array<i64: 2, 256>}]} {
    %c0 = arith.constant 0 : index
    %c0_0 = arith.constant 0 : index
    %0 = vector.load %arg1[%c0, %c0_0] : memref<2x256xf32, #tpu.memory_space<vmem>>, vector<2x256xf32>
    %c0_1 = arith.constant 0 : index
    %c0_2 = arith.constant 0 : index
    %1 = vector.load %arg2[%c0_1, %c0_2] : memref<1x256xf32, #tpu.memory_space<vmem>>, vector<1x256xf32>
    %2 = vector.broadcast %1 : vector<1x256xf32> to vector<2x256xf32>
    %3 = arith.addf %0, %2 : vector<2x256xf32>
    %c0_3 = arith.constant 0 : index
    %c0_4 = arith.constant 0 : index
    %4 = vector.load %arg3[%c0_3, %c0_4] : memref<2x256xf32, #tpu.memory_space<vmem>>, vector<2x256xf32>
    tpu.vector_store %arg3[%c0_3, %c0_4], %3 {strides = array<i32>} : memref<2x256xf32, #tpu.memory_space<vmem>>, vector<2x256xf32>,
    return
  }
  func.func @transform_0(%arg0: i32) -> (i32, i32) {
    %c0_i32 = arith.constant 0 : i32
    %c0_i32_0 = arith.constant 0 : i32
    return %c0_i32, %arg0 : i32, i32
  }
  func.func @transform_1(%arg0: i32) -> (i32, i32) {
    %c0_i32 = arith.constant 0 : i32
    %c0_i32_0 = arith.constant 0 : i32
    return %c0_i32, %arg0 : i32, i32
  }
  func.func @transform_2(%arg0: i32) -> (i32, i32) {
    %c0_i32 = arith.constant 0 : i32
    %c0_i32_0 = arith.constant 0 : i32
    return %c0_i32, %arg0 : i32, i32
  }
}

</mosaic_0001>

<llo_original>
// kernel: tpu_custom_call.1
$region0: #{tpu_custom_call.1}
  #allocation0 [shape = 'u32[]', space=smem, size = 0x4, offset = 0x4, fixed_abs, tag = 'smem constant byte address 0x4 - core index']
  #allocation1 [shape = 'u32[144,128]{1,0:T(1,128)}', space=vmem, size = 0x12000, scoped, tag = 'internal scratch']
  %s0 = inlined_call_operand.hbm [shape: f32[2,256], index: 0, kind: input, shape index: {}]
  %s1 = inlined_call_operand.vmem [shape: f32[1,256], index: 1, kind: input, shape index: {}]
  %s2 = inlined_call_operand.hbm [shape: f32[2,256], index: 2, kind: output, shape index: {}]
  %s3 = sld [smem:[#allocation0]]
  $region22: #{tpu_custom_call.1} parent=0
    _
  %s5 = ssub.s32 1, %s3
  %s6 = scalar_select 0, %s5, %s3
  $region1: #{tpu_custom_call.1} parent=0
    #allocation2 [shape = 'u8[2048]{0}', space=vmem, size = 0x800, scoped, tag = 'input window, operand 0, single buffered']
    #allocation3 [shape = 's32[1]{0}', space=sflag, size = 0x4, scoped, tag = 'scoped memory for tpu_custom_call.1']
    #allocation4 [shape = 's32[1]{0}', space=sflag, size = 0x4, scoped, tag = 'scoped memory for tpu_custom_call.1']
    #allocation5 [shape = 'u8[2048]{0}', space=vmem, size = 0x800, scoped, tag = 'output window, operand 0, single buffered']
    %7 = vsyncpa [#allocation3], 0
    %8 = vsyncpa [#allocation4], 0
    // Predicated region
    $region2: #{tpu_custom_call.1} parent=1 // pred_check
      _
    $region3: #{tpu_custom_call.1} parent=1 // pred_check_branch
      %10 = sbr.rel (0) target = $region5
    $region4: #{tpu_custom_call.1} parent=1 // pred_region
      %s12 = ssub.s32 64, 64
      %13 = vsyncadd [#allocation3], %s12
      %s15 = sshll.u32 [#allocation2], 4
      %s16 = int_to_ptr.vmem [resolvable:$true] %s15
      %18 = dma.hbm_to_vmem [thread:$0]  %s0, 64, %s16, [#allocation3]
    $region5: #{tpu_custom_call.1} parent=1 // pred_fallthru
      _
    // Predicated region
    $region6: #{tpu_custom_call.1} parent=1 // pred_check
      _
    $region7: #{tpu_custom_call.1} parent=1 // pred_check_branch
      %20 = sbr.rel (0) target = $region9
    $region8: #{tpu_custom_call.1} parent=1 // pred_region
      _
    $region9: #{tpu_custom_call.1} parent=1 // pred_fallthru
      _
    // Predicated region
    $region10: #{tpu_custom_call.1} parent=1 // pred_check
      _
    $region11: #{tpu_custom_call.1} parent=1 // pred_check_branch
      %22 = sbr.rel (0) target = $region13
    $region12: #{tpu_custom_call.1} parent=1 // pred_region
      %23 = dma.done [#allocation3], 64
    $region13: #{tpu_custom_call.1} parent=1 // pred_fallthru
      _
    %v24 = vld [vmem:[#allocation2] sm:$0xf]
    %v25 = vld [vmem:[%s1] sm:$0x3]
    %v27 = vlaneseq
    %v28 = vshrl.u32 %v27, 7
    %v29 = vsub.s32 0, %v28
    %v30 = vrot.slane %v25, %v29
    %v31 = vlaneseq
    %v32 = vshrl.u32 %v31, 7
    %v33 = vsub.s32 1, %v32
    %v34 = vrot.slane %v25, %v33
    %v35 = vcombine.low %v30, %v34
    %v37 = vunpack.c.l.s4 1983009808
    %v38 = vunpack.c.0.s8 %v37
    %v39 = vlaneseq
    %v40 = vshrl.u32 %v39, 7
    %v41 = vsub.s32 %v38, %v40
    %v42 = vrot.slane %v35, %v41
    %v44 = vadd.f32 %v24, %v42
    %45 = vst [vmem:[#allocation5] sm:$0xf] %v44
    // Predicated region
    $region14: #{tpu_custom_call.1} parent=1 // pred_check
      _
    $region15: #{tpu_custom_call.1} parent=1 // pred_check_branch
      %47 = sbr.rel (0) target = $region17
    $region16: #{tpu_custom_call.1} parent=1 // pred_region
      %s49 = ssub.s32 64, 64
      %50 = vsyncadd [#allocation4], %s49
      %s52 = sshll.u32 [#allocation5], 4
      %s53 = int_to_ptr.vmem [resolvable:$true] %s52
      %55 = dma.vmem_to_hbm [thread:$0]  %s53, 64, %s2, [#allocation4]
    $region17: #{tpu_custom_call.1} parent=1 // pred_fallthru
      _
    // Predicated region
    $region18: #{tpu_custom_call.1} parent=1 // pred_check
      _
    $region19: #{tpu_custom_call.1} parent=1 // pred_check_branch
      %57 = sbr.rel (0) target = $region21
    $region20: #{tpu_custom_call.1} parent=1 // pred_region
      %58 = dma.done [#allocation4], 64
    $region21: #{tpu_custom_call.1} parent=1 // pred_fallthru
      _
    %59 = vsyncpa [#allocation3], 1
    %60 = vsyncpa [#allocation4], 1

</llo_original>
